<compile_context>
chip_gen: v5e
topology: v5e:2x2
jax: 0.10.0
libtpu: 0.0.40
codegen_flags: <defaults>
</compile_context>

<pallas_src>
import re
import numpy as np
import jax
import jax.numpy as jnp
from jax.experimental import pallas as pl
from jax.experimental.pallas import tpu as pltpu

UNK_idx = 0
_LANE = 128
_TILE_CAP = 1024      # 512-1024 per perf review; multiple of 16 (int16 tile)
_MIN_TILE = 16        # int16 packs (16,128) per vreg tile


def _round_up(x, m):
    return ((x + m - 1) // m) * m


def _choose_tile_rows(B):
    """Pick the batch-tile size.

    Large enough that the ~0.35us per-grid-step overhead is amortized, small
    enough (<= ~B/2, rounded to 16) that moderate batches still yield >=2 grid
    steps for dual-TensorCore sharding on v7x.  Tiny batches (<~32 rows) get a
    single 16-row block -- splitting those is pure overhead.
    """
    half = _round_up(max((B + 1) // 2, 1), _MIN_TILE)
    return max(_MIN_TILE, min(_TILE_CAP, half))


# ----------------------------- Pallas kernel ------------------------------- #
def _custom_loss_kernel(pred_ref, tgt_ref, len_ref, out_ref):
    # pred_ref / tgt_ref : [TB, Lpad] int16 word indices (pad lanes ignored)
    # len_ref            : [TB, 1]    int32 valid length per row (0 => pad row)
    # out_ref            : [1, 8, 128] f32 per-block partial loss (lane-dense)
    pred = pred_ref[...].astype(jnp.float32)      # direct int16 -> f32
    tgt = tgt_ref[...].astype(jnp.float32)
    lens = len_ref[...]                           # [TB, 1] int32

    pos = jax.lax.broadcasted_iota(jnp.int32, pred.shape, dimension=1)
    valid = pos < lens                            # [TB, Lpad] bool
    neg_big = jnp.float32(-1e30)
    tiny = jnp.float32(1e-30)
    zero = jnp.float32(0.0)

    # predicted_probs = softmax(pred) over valid lanes.
    # Invalid lanes: exp(-1e30 - max) underflows to exactly 0 -> no post-exp
    # masking select needed; p is exactly 0 on invalid lanes.
    xm = jnp.where(valid, pred, neg_big)
    xmax = jnp.max(xm, axis=-1, keepdims=True)
    e_p = jnp.exp(xm - xmax)
    s_p = jnp.maximum(jnp.sum(e_p, axis=-1, keepdims=True), tiny)
    p = e_p * pl.reciprocal(s_p, approx=True)     # [TB, Lpad]

    # target softmax kept UNNORMALIZED; normalization folded per-row below.
    ym = jnp.where(valid, tgt, neg_big)
    ymax = jnp.max(ym, axis=-1, keepdims=True)
    e_t = jnp.exp(ym - ymax)                      # 0 on invalid lanes
    s_t = jnp.maximum(jnp.sum(e_t, axis=-1, keepdims=True), tiny)

    # CrossEntropyLoss(p, t) = -sum(t * log_softmax(p))
    #                        = log(sum_valid exp(p)) - sum(t * p)   (sum t = 1)
    # exp(p) on invalid lanes would be exp(0)=1, so mask it (cheap VALU select;
    # the kernel is EUP/HBM-bound, VALU slots have slack).
    e_pp = jnp.where(valid, jnp.exp(p), zero)
    psum = jnp.maximum(jnp.sum(e_pp, axis=-1, keepdims=True), tiny)

    # per-row scalar: sum(t*p) = sum(e_t*p)/s_t  (e_t and p already 0 on pads).
    tp = jnp.sum(e_t * p, axis=-1, keepdims=True) / s_t       # exact divide

    per_row = jnp.log(psum) - tp                               # [TB, 1]
    # REQUIRED guard for the rewritten form: padding / zero-length rows would
    # otherwise contribute log(tiny) instead of 0.
    per_row = jnp.where(lens > 0, per_row, zero)

    block_sum = jnp.sum(per_row)
    out_ref[...] = jnp.full(out_ref.shape, block_sum, dtype=jnp.float32)


def custom_loss_pallas(pred_idx, tgt_idx, lengths, tile_rows, true_batch):
    """pred_idx/tgt_idx: [B_pad, Lpad] int16; lengths: [B_pad, 1] int32.
    B_pad is a multiple of tile_rows.  Returns scalar f32 loss (mean over the
    TRUE batch size)."""
    B_pad, Lpad = pred_idx.shape
    nb = B_pad // tile_rows
    elems = B_pad * Lpad
    cost = pl.CostEstimate(
        flops=12 * elems,                         # casts/selects/muls/reduces
        transcendentals=3 * elems,                # 2 softmax exps + exp(p)
        bytes_accessed=2 * 2 * elems + 4 * B_pad + nb * 8 * _LANE * 4,
    )
    partials = pl.pallas_call(
        _custom_loss_kernel,
        out_shape=jax.ShapeDtypeStruct((nb, 8, _LANE), jnp.float32),
        grid_spec=pltpu.PrefetchScalarGridSpec(
            num_scalar_prefetch=0,
            grid=(nb,),
            in_specs=[
                pl.BlockSpec((tile_rows, Lpad), lambda i: (i, 0)),
                pl.BlockSpec((tile_rows, Lpad), lambda i: (i, 0)),
                pl.BlockSpec((tile_rows, 1), lambda i: (i, 0)),
            ],
            out_specs=pl.BlockSpec((1, 8, _LANE), lambda i: (i, 0, 0)),
        ),
        # independent blocks -> shards across both v7x TensorCores
        compiler_params=pltpu.CompilerParams(
            dimension_semantics=("parallel",)),
        cost_estimate=cost,
    )(pred_idx, tgt_idx, lengths)
    inv_b = jnp.float32(1.0) / jnp.float32(true_batch)
    return jnp.sum(partials[:, 0, 0]) * inv_b


# ------------------------------ glue (host) -------------------------------- #
class Vocab:
    def __init__(self, words):
        self.word2index = {"<unk>": UNK_idx}
        for w in words:
            if w not in self.word2index:
                self.word2index[w] = len(self.word2index)


def clean_sentence(sentence):
    return re.sub(r'[^\w\s]', '', sentence)


def filter_and_select_words(sentence, vocab):
    # TODO(synk): nltk pos_tag (POS filtering to N/V/J/P) and the dead
    # TF-IDF path have no Pallas/JAX equivalent; approximated by keeping all
    # in-vocab words.
    return [w for w in clean_sentence(sentence).split() if w in vocab.word2index]


def prepare_batch(predicted, target, vocab, lane_pad=_LANE):
    """Replicates the per-pair pad/truncate + vocab lookup of CustomLoss.forward,
    packing indices as int16 rows plus a per-row int32 length sidecar."""
    assert len(vocab.word2index) <= 32767, (
        "vocabulary too large for int16 index shipping")
    pred_rows, tgt_rows, lens = [], [], []
    for pred_seq, target_seq in zip(predicted, target):
        fp = filter_and_select_words(pred_seq, vocab)
        ft = filter_and_select_words(target_seq, vocab)
        L = len(ft)
        if len(fp) < L:
            fp = fp + [''] * (L - len(fp))
        else:
            fp = fp[:L]
        p_idx = [vocab.word2index.get(w, UNK_idx) for w in fp]
        t_idx = [vocab.word2index.get(w, UNK_idx) for w in ft]
        pred_rows.append(p_idx)
        tgt_rows.append(t_idx)
        lens.append(L)

    B = len(pred_rows)
    Lmax = max(max(lens), 1)
    # TODO(synk): if real sequences are much shorter than 128 tokens, pack
    # several sequences per 128-lane row (segmented reductions) -- padding
    # lanes dominate HBM bytes and EUP work in that regime.
    Lpad = _round_up(Lmax, lane_pad)
    tile_rows = _choose_tile_rows(B)
    B_pad = _round_up(B, tile_rows)

    pred_arr = np.zeros((B_pad, Lpad), np.int16)
    tgt_arr = np.zeros((B_pad, Lpad), np.int16)
    len_arr = np.zeros((B_pad, 1), np.int32)
    for b in range(B):
        L = lens[b]
        pred_arr[b, :L] = pred_rows[b]
        tgt_arr[b, :L] = tgt_rows[b]
        len_arr[b, 0] = L
    return (jnp.asarray(pred_arr), jnp.asarray(tgt_arr), jnp.asarray(len_arr),
            tile_rows, B, pred_rows, tgt_rows)


def reference_loss(pred_rows, tgt_rows):
    """Pure-numpy replica of the PyTorch numeric path, for sanity checking."""
    def softmax(x):
        x = x - x.max()
        e = np.exp(x)
        return e / e.sum()
    total = 0.0
    for p, t in zip(pred_rows, tgt_rows):
        p = np.asarray(p, np.float32)
        t = np.asarray(t, np.float32)
        sp, st = softmax(p), softmax(t)
        ls = sp - (sp.max() + np.log(np.exp(sp - sp.max()).sum()))
        total += float(-(st * ls).sum())
    return total / len(pred_rows)


# --------------------------------- main ------------------------------------ #
if __name__ == "__main__":
    word_list = ["the", "cat", "dog", "sat", "ran", "on", "mat", "fast",
                 "red", "blue", "house", "tree", "jumped", "over", "lazy",
                 "quick", "fox", "river", "bird", "sky"]
    vocab = Vocab(word_list)

    # Deterministic synthetic "sentences" built from PRNGKey(0) draws.
    key = jax.random.PRNGKey(0)
    pred_lens = [6, 9, 4, 7]
    tgt_lens = [5, 7, 6, 8]
    predicted, target = [], []
    for pl_len, tl_len in zip(pred_lens, tgt_lens):
        key, k1, k2 = jax.random.split(key, 3)
        p_ids = jax.random.randint(k1, (pl_len,), 0, len(word_list))
        t_ids = jax.random.randint(k2, (tl_len,), 0, len(word_list))
        predicted.append(" ".join(word_list[int(i)] for i in p_ids) + "!")
        target.append(" ".join(word_list[int(i)] for i in t_ids) + ".")

    (pred_idx, tgt_idx, lengths, tile_rows, true_b,
     pred_rows, tgt_rows) = prepare_batch(predicted, target, vocab)

    loss = custom_loss_pallas(pred_idx, tgt_idx, lengths, tile_rows, true_b)
    loss = jax.block_until_ready(loss)

    ref = reference_loss(pred_rows, tgt_rows)
    assert np.isfinite(float(loss)), "kernel produced non-finite loss"
    # slightly loose tolerance: approx-reciprocal in the predicted softmax
    np.testing.assert_allclose(float(loss), ref, rtol=5e-3, atol=2e-3)
    print("KERNEL_OK")
</pallas_src>

<mosaic_0001>
module attributes {stable_mosaic.version = 11 : i64} {
  func.func @_custom_loss_kernel(%arg0: i32, %arg1: memref<16x128xi16, #tpu.memory_space<vmem>>, %arg2: memref<16x128xi16, #tpu.memory_space<vmem>>, %arg3: memref<16x1xi32, #tpu.memory_space<vmem>>, %arg4: memref<1x8x128xf32, #tpu.memory_space<vmem>>) attributes {dimension_semantics = [#tpu.dimension_semantics<parallel>], iteration_bounds = array<i64: 1>, scalar_prefetch = 0 : i64, scratch_operands = 0 : i64, tpu.core_type = #tpu.core_type<tc>, window_params = [{transform_indices = @transform_0, window_bounds = array<i64: 16, 128>}, {transform_indices = @transform_1, window_bounds = array<i64: 16, 128>}, {transform_indices = @transform_2, window_bounds = array<i64: 16, 1>}, {transform_indices = @transform_3, window_bounds = array<i64: 1, 8, 128>}]} {
    %c0 = arith.constant 0 : index
    %c0_0 = arith.constant 0 : index
    %0 = vector.load %arg1[%c0, %c0_0] : memref<16x128xi16, #tpu.memory_space<vmem>>, vector<16x128xi16>
    %1 = arith.sitofp %0 : vector<16x128xi16> to vector<16x128xf32>
    %c0_1 = arith.constant 0 : index
    %c0_2 = arith.constant 0 : index
    %2 = vector.load %arg2[%c0_1, %c0_2] : memref<16x128xi16, #tpu.memory_space<vmem>>, vector<16x128xi16>
    %3 = arith.sitofp %2 : vector<16x128xi16> to vector<16x128xf32>
    %c0_3 = arith.constant 0 : index
    %c0_4 = arith.constant 0 : index
    %4 = vector.load %arg3[%c0_3, %c0_4] : memref<16x1xi32, #tpu.memory_space<vmem>>, vector<16x1xi32>
    %5 = tpu.iota {dimensions = array<i32: 1>} : vector<16x128xi32>
    %6 = vector.broadcast %4 : vector<16x1xi32> to vector<16x128xi32>
    %7 = arith.cmpi slt, %5, %6 : vector<16x128xi32>
    %cst = arith.constant -1.000000e+30 : f32
    %8 = vector.broadcast %cst : f32 to vector<16x128xf32>
    %9 = arith.select %7, %1, %8 : vector<16x128xi1>, vector<16x128xf32>
    %cst_5 = arith.constant dense<0xFF800000> : vector<16xf32>
    %10 = vector.multi_reduction <maximumf>, %9, %cst_5 [1] : vector<16x128xf32> to vector<16xf32>
    %11 = vector.shape_cast %10 : vector<16xf32> to vector<16x1xf32>
    %12 = vector.broadcast %11 : vector<16x1xf32> to vector<16x128xf32>
    %13 = arith.subf %9, %12 : vector<16x128xf32>
    %14 = math.exp %13 : vector<16x128xf32>
    %cst_6 = arith.constant dense<0.000000e+00> : vector<16xf32>
    %15 = vector.multi_reduction <add>, %14, %cst_6 [1] : vector<16x128xf32> to vector<16xf32>
    %16 = vector.shape_cast %15 : vector<16xf32> to vector<16x1xf32>
    %cst_7 = arith.constant 1.000000e-30 : f32
    %17 = vector.broadcast %cst_7 : f32 to vector<16x1xf32>
    %18 = arith.maximumf %16, %17 : vector<16x1xf32>
    %19 = tpu.reciprocal %18 {approx = true} : vector<16x1xf32> -> vector<16x1xf32>
    %20 = vector.broadcast %19 : vector<16x1xf32> to vector<16x128xf32>
    %21 = arith.mulf %14, %20 : vector<16x128xf32>
    %cst_8 = arith.constant -1.000000e+30 : f32
    %22 = vector.broadcast %cst_8 : f32 to vector<16x128xf32>
    %23 = arith.select %7, %3, %22 : vector<16x128xi1>, vector<16x128xf32>
    %cst_9 = arith.constant dense<0xFF800000> : vector<16xf32>
    %24 = vector.multi_reduction <maximumf>, %23, %cst_9 [1] : vector<16x128xf32> to vector<16xf32>
    %25 = vector.shape_cast %24 : vector<16xf32> to vector<16x1xf32>
    %26 = vector.broadcast %25 : vector<16x1xf32> to vector<16x128xf32>
    %27 = arith.subf %23, %26 : vector<16x128xf32>
    %28 = math.exp %27 : vector<16x128xf32>
    %cst_10 = arith.constant dense<0.000000e+00> : vector<16xf32>
    %29 = vector.multi_reduction <add>, %28, %cst_10 [1] : vector<16x128xf32> to vector<16xf32>
    %30 = vector.shape_cast %29 : vector<16xf32> to vector<16x1xf32>
    %cst_11 = arith.constant 1.000000e-30 : f32
    %31 = vector.broadcast %cst_11 : f32 to vector<16x1xf32>
    %32 = arith.maximumf %30, %31 : vector<16x1xf32>
    %33 = math.exp %21 : vector<16x128xf32>
    %cst_12 = arith.constant 0.000000e+00 : f32
    %34 = vector.broadcast %cst_12 : f32 to vector<16x128xf32>
    %35 = arith.select %7, %33, %34 : vector<16x128xi1>, vector<16x128xf32>
    %cst_13 = arith.constant dense<0.000000e+00> : vector<16xf32>
    %36 = vector.multi_reduction <add>, %35, %cst_13 [1] : vector<16x128xf32> to vector<16xf32>
    %37 = vector.shape_cast %36 : vector<16xf32> to vector<16x1xf32>
    %cst_14 = arith.constant 1.000000e-30 : f32
    %38 = vector.broadcast %cst_14 : f32 to vector<16x1xf32>
    %39 = arith.maximumf %37, %38 : vector<16x1xf32>
    %40 = arith.mulf %28, %21 : vector<16x128xf32>
    %cst_15 = arith.constant dense<0.000000e+00> : vector<16xf32>
    %41 = vector.multi_reduction <add>, %40, %cst_15 [1] : vector<16x128xf32> to vector<16xf32>
    %42 = vector.shape_cast %41 : vector<16xf32> to vector<16x1xf32>
    %43 = arith.divf %42, %32 : vector<16x1xf32>
    %44 = math.log %39 : vector<16x1xf32>
    %45 = arith.subf %44, %43 : vector<16x1xf32>
    %c0_i32 = arith.constant 0 : i32
    %46 = vector.broadcast %c0_i32 : i32 to vector<16x1xi32>
    %47 = arith.cmpi sgt, %4, %46 : vector<16x1xi32>
    %cst_16 = arith.constant 0.000000e+00 : f32
    %48 = vector.broadcast %cst_16 : f32 to vector<16x1xf32>
    %49 = arith.select %47, %45, %48 : vector<16x1xi1>, vector<16x1xf32>
    %50 = vector.shape_cast %49 : vector<16x1xf32> to vector<1x16x1xf32>
    %cst_17 = arith.constant dense<0.000000e+00> : vector<1xf32>
    %51 = vector.multi_reduction <add>, %50, %cst_17 [1, 2] : vector<1x16x1xf32> to vector<1xf32>
    %52 = vector.shape_cast %51 : vector<1xf32> to vector<1x1x1xf32>
    %53 = vector.extract %52[0, 0, 0] : f32 from vector<1x1x1xf32>
    %54 = vector.broadcast %53 : f32 to vector<1x8x128xf32>
    %c0_18 = arith.constant 0 : index
    %c0_19 = arith.constant 0 : index
    %c0_20 = arith.constant 0 : index
    %55 = vector.load %arg4[%c0_18, %c0_19, %c0_20] : memref<1x8x128xf32, #tpu.memory_space<vmem>>, vector<1x8x128xf32>
    tpu.vector_store %arg4[%c0_18, %c0_19, %c0_20], %54 {strides = array<i32>} : memref<1x8x128xf32, #tpu.memory_space<vmem>>, vector<1x8x128xf32>,
    return
  }
  func.func @transform_0(%arg0: i32) -> (i32, i32) {
    %c0_i32 = arith.constant 0 : i32
    %c0_i32_0 = arith.constant 0 : i32
    return %arg0, %c0_i32 : i32, i32
  }
  func.func @transform_1(%arg0: i32) -> (i32, i32) {
    %c0_i32 = arith.constant 0 : i32
    %c0_i32_0 = arith.constant 0 : i32
    return %arg0, %c0_i32 : i32, i32
  }
  func.func @transform_2(%arg0: i32) -> (i32, i32) {
    %c0_i32 = arith.constant 0 : i32
    %c0_i32_0 = arith.constant 0 : i32
    return %arg0, %c0_i32 : i32, i32
  }
  func.func @transform_3(%arg0: i32) -> (i32, i32, i32) {
    %c0_i32 = arith.constant 0 : i32
    %c0_i32_0 = arith.constant 0 : i32
    %c0_i32_1 = arith.constant 0 : i32
    return %arg0, %c0_i32, %c0_i32_0 : i32, i32, i32
  }
}

</mosaic_0001>

<llo_original>
// kernel: tpu_custom_call.1
$region0: #{tpu_custom_call.1}
  #allocation0 [shape = 'u32[]', space=smem, size = 0x4, offset = 0x4, fixed_abs, tag = 'smem constant byte address 0x4 - core index']
  #allocation1 [shape = 'u32[72,128]{1,0:T(1,128)}', space=vmem, size = 0x9000, scoped, tag = 'internal scratch']
  %s0 = inlined_call_operand.vmem [shape: s16[16,128], index: 0, kind: input, shape index: {}]
  %s1 = inlined_call_operand.vmem [shape: s16[16,128], index: 1, kind: input, shape index: {}]
  %s2 = inlined_call_operand.vmem [shape: s32[16,1], index: 2, kind: input, shape index: {}]
  %s3 = inlined_call_operand.hbm [shape: f32[1,8,128], index: 3, kind: output, shape index: {}]
  %s4 = sld [smem:[#allocation0]]
  $region22: #{tpu_custom_call.1} parent=0
    _
  %s6 = ssub.s32 1, %s4
  %s7 = scalar_select 0, %s6, %s4
  $region1: #{tpu_custom_call.1} parent=0
    #allocation2 [shape = 'u8[4096]{0}', space=vmem, size = 0x1000, scoped, tag = 'output window, operand 0, single buffered']
    #allocation3 [shape = 's32[1]{0}', space=sflag, size = 0x4, scoped, tag = 'scoped memory for tpu_custom_call.1']
    %8 = vsyncpa [#allocation3], 0
    // Predicated region
    $region2: #{tpu_custom_call.1} parent=1 // pred_check
      _
    $region3: #{tpu_custom_call.1} parent=1 // pred_check_branch
      %10 = sbr.rel (0) target = $region5
    $region4: #{tpu_custom_call.1} parent=1 // pred_region
      _
    $region5: #{tpu_custom_call.1} parent=1 // pred_fallthru
      _
    // Predicated region
    $region6: #{tpu_custom_call.1} parent=1 // pred_check
      _
    $region7: #{tpu_custom_call.1} parent=1 // pred_check_branch
      %12 = sbr.rel (0) target = $region9
    $region8: #{tpu_custom_call.1} parent=1 // pred_region
      _
    $region9: #{tpu_custom_call.1} parent=1 // pred_fallthru
      _
    // Predicated region
    $region10: #{tpu_custom_call.1} parent=1 // pred_check
      _
    $region11: #{tpu_custom_call.1} parent=1 // pred_check_branch
      %14 = sbr.rel (0) target = $region13
    $region12: #{tpu_custom_call.1} parent=1 // pred_region
      _
    $region13: #{tpu_custom_call.1} parent=1 // pred_fallthru
      _
    %v15 = vld [vmem:[%s0] sm:$0xf]
    %v16 = vld [vmem:[%s0 + $0x4] sm:$0xf]
    %v17 = vunpack.c.l.b16 %v15
    %v18 = vunpack.c.l.b16 %v16
    %v19 = vcvt.s32.f32 %v17
    %v20 = vcvt.s32.f32 %v18
    %v21 = vld [vmem:[%s1] sm:$0xf]
    %v22 = vld [vmem:[%s1 + $0x4] sm:$0xf]
    %v23 = vunpack.c.l.b16 %v21
    %v24 = vunpack.c.l.b16 %v22
    %v25 = vcvt.s32.f32 %v23
    %v26 = vcvt.s32.f32 %v24
    %v27 = vld [vmem:[%s2] sm:$0xff]
    %v28 = vld [vmem:[%s2 + $0x8] sm:$0xff]
    %v29 = vlaneseq
    %v30 = vand.u32 %v29, 127
    %31 = vset.pattern.permute.xlu0 0
    %32 = vperm.xlu0 %31, %v27
    %v33 = vpop.permute.xlu0 %32
    %34 = vset.pattern.permute.xlu0 0
    %35 = vperm.xlu0 %34, %v28
    %v36 = vpop.permute.xlu0 %35
    %vm37 = vcmp.lt.s32.totalorder %v30, %v33
    %vm38 = vcmp.lt.s32.totalorder %v30, %v36
    %v39 = vsel %vm37, %v19, -1e+30
    %v40 = vsel %vm38, %v20, -1e+30
    %41 = vmax.xlane.f32.xlu0 %v39
    %v42 = vpop.xlane.xlu0 %41
    %43 = vmax.xlane.f32.xlu0 %v40
    %v44 = vpop.xlane.xlu0 %43
    %v45 = vsub.f32 %v39, %v42
    %v46 = vsub.f32 %v40, %v44
    %v47 = vmul.f32 %v45, 1.442695
    %v48 = vpow.pop %v47
    %v49 = vmul.f32 %v46, 1.442695
    %v50 = vpow.pop %v49
    %51 = vadd.xlane.f32.xlu0 %v48
    %v52 = vpop.xlane.xlu0 %51
    %53 = vadd.xlane.f32.xlu0 %v50
    %v54 = vpop.xlane.xlu0 %53
    %v55 = vmax.f32 %v52, 1e-30
    %v56 = vmax.f32 %v54, 1e-30
    %v57 = vrcp.pop %v55
    %v58 = vrcp.pop %v56
    %v59 = vmul.f32 %v48, %v57
    %v60 = vmul.f32 %v50, %v58
    %v61 = vsel %vm37, %v25, -1e+30
    %v62 = vsel %vm38, %v26, -1e+30
    %63 = vmax.xlane.f32.xlu0 %v61
    %v64 = vpop.xlane.xlu0 %63
    %65 = vmax.xlane.f32.xlu0 %v62
    %v66 = vpop.xlane.xlu0 %65
    %v67 = vsub.f32 %v61, %v64
    %v68 = vsub.f32 %v62, %v66
    %v69 = vmul.f32 %v67, 1.442695
    %v70 = vpow.pop %v69
    %v71 = vmul.f32 %v68, 1.442695
    %v72 = vpow.pop %v71
    %73 = vadd.xlane.f32.xlu0 %v70
    %v74 = vpop.xlane.xlu0 %73
    %75 = vadd.xlane.f32.xlu0 %v72
    %v76 = vpop.xlane.xlu0 %75
    %v77 = vmax.f32 %v74, 1e-30
    %v78 = vmax.f32 %v76, 1e-30
    %v79 = vmul.f32 %v59, 1.442695
    %v80 = vpow.pop %v79
    %v81 = vmul.f32 %v60, 1.442695
    %v82 = vpow.pop %v81
    %v83 = vsel %vm37, %v80, 0.0
    %v84 = vsel %vm38, %v82, 0.0
    %85 = vadd.xlane.f32.xlu0 %v83
    %v86 = vpop.xlane.xlu0 %85
    %87 = vadd.xlane.f32.xlu0 %v84
    %v88 = vpop.xlane.xlu0 %87
    %v89 = vmax.f32 %v86, 1e-30
    %v90 = vmax.f32 %v88, 1e-30
    %v91 = vmul.f32 %v70, %v59
    %v92 = vmul.f32 %v72, %v60
    %93 = vadd.xlane.f32.xlu0 %v91
    %v94 = vpop.xlane.xlu0 %93
    %95 = vadd.xlane.f32.xlu0 %v92
    %v96 = vpop.xlane.xlu0 %95
    %v97 = vrcp.pop %v77
    %v98 = vmul.f32 %v77, %v97
    %v99 = vsub.f32 1.0, %v98
    %v100 = vmul.f32 %v97, %v99
    %v101 = vadd.f32 %v97, %v100
    %vm102 = vweird.f32 %v77
    %vm103 = vweird.f32 %v97
    %vm104 = vmor %vm102, %vm103
    %v105 = vsel %vm104, %v97, %v101
    %v106 = vand.u32 2147483647, %v77
    %vm107 = vcmp.eq.f32.partialorder %v106, 8.507059e+37
    %v108 = vand.u32 %v77, 2147483648
    %v109 = vor.u32 1.1754944e-38, %v108
    %v110 = vsel %vm107, %v109, %v105
    %v111 = vmul.f32 %v94, %v110
    %v112 = vrcp.pop %v78
    %v113 = vmul.f32 %v78, %v112
    %v114 = vsub.f32 1.0, %v113
    %v115 = vmul.f32 %v112, %v114
    %v116 = vadd.f32 %v112, %v115
    %vm117 = vweird.f32 %v78
    %vm118 = vweird.f32 %v112
    %vm119 = vmor %vm117, %vm118
    %v120 = vsel %vm119, %v112, %v116
    %v121 = vand.u32 2147483647, %v78
    %vm122 = vcmp.eq.f32.partialorder %v121, 8.507059e+37
    %v123 = vand.u32 %v78, 2147483648
    %v124 = vor.u32 1.1754944e-38, %v123
    %v125 = vsel %vm122, %v124, %v120
    %v126 = vmul.f32 %v96, %v125
    %v127 = vlog2.pop %v89
    %v128 = vmul.f32 %v127, 0.6931472
    %v129 = vlog2.pop %v90
    %v130 = vmul.f32 %v129, 0.6931472
    %v131 = vsub.f32 %v128, %v111
    %v132 = vsub.f32 %v130, %v126
    %vm133 = vcmp.gt.s32.totalorder %v27, 0
    %vm134 = vcmp.gt.s32.totalorder %v28, 0
    %v135 = vsel %vm133, %v131, 0.0
    %v136 = vsel %vm134, %v132, 0.0
    %vm137 = vcmask 7168
    %v138 = vsel %vm137, %v135, 0.0
    %v139 = vsel %vm137, %v136, 0.0
    %v140 = vadd.f32 %v138, %v139
    %141 = vadd.xlane.f32.xlu0 %v140
    %v142 = vpop.xlane.xlu0 %141
    %v143 = vrot.slane %v142, 4
    %v144 = vadd.f32 %v142, %v143
    %v145 = vrot.slane %v144, 2
    %v146 = vadd.f32 %v144, %v145
    %v147 = vrot.slane %v146, 1
    %v148 = vadd.f32 %v146, %v147
    %s149 = vtos %v148
    %v150 = vstv %s149
    %151 = vst [vmem:[#allocation2] sm:$0xff] %v150
    // Predicated region
    $region14: #{tpu_custom_call.1} parent=1 // pred_check
      _
    $region15: #{tpu_custom_call.1} parent=1 // pred_check_branch
      %153 = sbr.rel (0) target = $region17
    $region16: #{tpu_custom_call.1} parent=1 // pred_region
      %155 = vsyncadd [#allocation3], 0
      %s157 = sshll.u32 [#allocation2], 4
      %s158 = int_to_ptr.vmem [resolvable:$true] %s157
      %s159 = sshll.u32 %s3, 4
      %s160 = int_to_ptr.hbm [resolvable:$true] %s159
      %162 = dma.vmem_to_hbm [thread:$0]  %s158, 128, %s160, [#allocation3]
    $region17: #{tpu_custom_call.1} parent=1 // pred_fallthru
      _
    // Predicated region
    $region18: #{tpu_custom_call.1} parent=1 // pred_check
      _
    $region19: #{tpu_custom_call.1} parent=1 // pred_check_branch
      %164 = sbr.rel (0) target = $region21
    $region20: #{tpu_custom_call.1} parent=1 // pred_region
      %166 = dma.done [#allocation3], 128
    $region21: #{tpu_custom_call.1} parent=1 // pred_fallthru
      _
    %167 = vsyncpa [#allocation3], 1

</llo_original>
